<compile_context>
chip_gen: v7x
topology: tpu7x:2x2x1
jax: 0.10.0
libtpu: 0.0.40
codegen_flags: <defaults>
</compile_context>

<pallas_src>
import functools

import jax
import jax.numpy as jnp
from jax.experimental import pallas as pl
from jax.experimental.pallas import tpu as pltpu


def _film_kernel(scale_ref, shift_ref, x_ref, o_ref):
    # scale_ref/shift_ref: (r_tile, 1)  per-row (= per batch*channel) FiLM params
    # x_ref/o_ref:         (r_tile, T)  spatial tile on the lane axis
    y = x_ref[...] * scale_ref[...] + shift_ref[...]
    o_ref[...] = y.astype(o_ref.dtype)


def _timestep_embedding(t, emb_dim):
    # Standard sinusoidal embedding (tiny glue compute, stays in XLA).
    half = emb_dim // 2
    freqs = jnp.exp(-jnp.log(10000.0) * jnp.arange(half, dtype=jnp.float32) / half)
    args = t.astype(jnp.float32)[:, None] * freqs[None, :]
    return jnp.concatenate([jnp.sin(args), jnp.cos(args)], axis=-1)  # (B, emb_dim)


def _largest_dividing_tile(n, unit, cap):
    """Largest t <= cap with t % unit == 0 and n % t == 0; else full dim n."""
    if n % unit != 0:
        return n  # full-extent block is always legal
    best = unit
    t = unit
    limit = min(n, cap)
    while t <= limit:
        if n % t == 0:
            best = t
        t += unit
    return best


@functools.partial(jax.jit, static_argnames=("emb_dim",))
def eps_model_forward(x_nchw, t, cond, w_t, w_c, *, emb_dim=32):
    """y = f(x, t, cond), y.shape == x.shape (NCHW)."""
    B, C, H, W = x_nchw.shape
    HW = H * W
    R = B * C

    # --- FiLM parameters: one small XLA matmul (hoisted out of the kernel) ---
    temb = _timestep_embedding(t, emb_dim)                           # (B, E)
    feats = jnp.concatenate([temb, cond.astype(jnp.float32)], -1)    # (B, E+D)
    w = jnp.concatenate(
        [w_t.astype(jnp.float32), w_c.astype(jnp.float32)], axis=0)  # (E+D, 2C)
    film = feats @ w                                                 # (B, 2C)
    scale1 = (1.0 + film[:, :C]).astype(x_nchw.dtype).reshape(R, 1)  # (B*C, 1)
    shift = film[:, C:].astype(x_nchw.dtype).reshape(R, 1)           # (B*C, 1)

    # --- Lane-dense relayout: NCHW already has HW contiguous, so this is free.
    x_rows = x_nchw.reshape(R, HW)                                   # (B*C, HW)

    # Tile sizes: largest dividing multiples of (8, 128) under caps, so each
    # double-buffered (in + out) block stays a few hundred KiB — comfortably
    # inside v7x's 64 MiB VMEM while large enough to hit the HBM roofline.
    lane_tile = _largest_dividing_tile(HW, 128, 2048)
    row_tile = _largest_dividing_tile(R, 8, 64)
    grid = (pl.cdiv(R, row_tile), pl.cdiv(HW, lane_tile))

    itemsize = jnp.dtype(x_nchw.dtype).itemsize
    cost = pl.CostEstimate(
        flops=2 * R * HW,
        transcendentals=0,
        bytes_accessed=2 * R * HW * itemsize + 2 * R * itemsize,
    )

    y_rows = pl.pallas_call(
        _film_kernel,
        out_shape=jax.ShapeDtypeStruct((R, HW), x_nchw.dtype),
        grid=grid,
        in_specs=[
            pl.BlockSpec((row_tile, 1), lambda r, s: (r, 0)),          # 1 + scale
            pl.BlockSpec((row_tile, 1), lambda r, s: (r, 0)),          # shift
            pl.BlockSpec((row_tile, lane_tile), lambda r, s: (r, s)),  # x tile
        ],
        out_specs=pl.BlockSpec((row_tile, lane_tile), lambda r, s: (r, s)),
        compiler_params=pltpu.CompilerParams(
            dimension_semantics=("parallel", "parallel"),
            vmem_limit_bytes=32 * 1024 * 1024,
        ),
        cost_estimate=cost,
    )(scale1, shift, x_rows)

    return y_rows.reshape(B, C, H, W)


def _reference(x_nchw, t, cond, w_t, w_c, emb_dim):
    # Pure-JAX reference for the correctness check.
    temb = _timestep_embedding(t, emb_dim)
    film = temb @ w_t + cond @ w_c                 # (B, 2C)
    C = x_nchw.shape[1]
    scale = film[:, :C][:, :, None, None]
    shift = film[:, C:][:, :, None, None]
    return x_nchw * (1.0 + scale) + shift


if __name__ == "__main__":
    B, C, H, W = 2, 4, 16, 16
    D_COND = 8
    EMB = 32

    key = jax.random.PRNGKey(0)
    kx, kt, kc, kw1, kw2 = jax.random.split(key, 5)

    x = jax.random.normal(kx, (B, C, H, W), dtype=jnp.float32)
    t = jax.random.uniform(kt, (B,), dtype=jnp.float32) * 1000.0
    cond = jax.random.normal(kc, (B, D_COND), dtype=jnp.float32)

    # Deterministic synthetic parameters (small init so modulation stays tame).
    w_t = jax.random.normal(kw1, (EMB, 2 * C), dtype=jnp.float32) * 0.02
    w_c = jax.random.normal(kw2, (D_COND, 2 * C), dtype=jnp.float32) * 0.02

    y = eps_model_forward(x, t, cond, w_t, w_c, emb_dim=EMB)
    y = jax.block_until_ready(y)

    assert y.shape == x.shape and y.dtype == x.dtype

    y_ref = _reference(x, t, cond, w_t, w_c, EMB)
    assert jnp.allclose(y, y_ref, atol=1e-5, rtol=1e-5), "mismatch vs reference"

    print("KERNEL_OK")
</pallas_src>

<mosaic_0001>
module attributes {stable_mosaic.version = 11 : i64} {
  func.func @_film_kernel(%arg0: i32, %arg1: i32, %arg2: memref<8x1xf32, #tpu.memory_space<vmem>>, %arg3: memref<8x1xf32, #tpu.memory_space<vmem>>, %arg4: memref<8x256xf32, #tpu.memory_space<vmem>>, %arg5: memref<8x256xf32, #tpu.memory_space<vmem>>) attributes {dimension_semantics = [#tpu.dimension_semantics<parallel>, #tpu.dimension_semantics<parallel>], iteration_bounds = array<i64: 1, 1>, scalar_prefetch = 0 : i64, scratch_operands = 0 : i64, tpu.core_type = #tpu.core_type<tc>, window_params = [{transform_indices = @transform_0, window_bounds = array<i64: 8, 1>}, {transform_indices = @transform_1, window_bounds = array<i64: 8, 1>}, {transform_indices = @transform_2, window_bounds = array<i64: 8, 256>}, {transform_indices = @transform_3, window_bounds = array<i64: 8, 256>}]} {
    %c0 = arith.constant 0 : index
    %c0_0 = arith.constant 0 : index
    %0 = vector.load %arg4[%c0, %c0_0] : memref<8x256xf32, #tpu.memory_space<vmem>>, vector<8x256xf32>
    %c0_1 = arith.constant 0 : index
    %c0_2 = arith.constant 0 : index
    %1 = vector.load %arg2[%c0_1, %c0_2] : memref<8x1xf32, #tpu.memory_space<vmem>>, vector<8x1xf32>
    %2 = vector.broadcast %1 : vector<8x1xf32> to vector<8x256xf32>
    %3 = arith.mulf %0, %2 : vector<8x256xf32>
    %c0_3 = arith.constant 0 : index
    %c0_4 = arith.constant 0 : index
    %4 = vector.load %arg3[%c0_3, %c0_4] : memref<8x1xf32, #tpu.memory_space<vmem>>, vector<8x1xf32>
    %5 = vector.broadcast %4 : vector<8x1xf32> to vector<8x256xf32>
    %6 = arith.addf %3, %5 : vector<8x256xf32>
    %c0_5 = arith.constant 0 : index
    %c0_6 = arith.constant 0 : index
    %7 = vector.load %arg5[%c0_5, %c0_6] : memref<8x256xf32, #tpu.memory_space<vmem>>, vector<8x256xf32>
    tpu.vector_store %arg5[%c0_5, %c0_6], %6 {strides = array<i32>} : memref<8x256xf32, #tpu.memory_space<vmem>>, vector<8x256xf32>,
    return
  }
  func.func @transform_0(%arg0: i32, %arg1: i32) -> (i32, i32) {
    %c0_i32 = arith.constant 0 : i32
    %c0_i32_0 = arith.constant 0 : i32
    return %arg0, %c0_i32 : i32, i32
  }
  func.func @transform_1(%arg0: i32, %arg1: i32) -> (i32, i32) {
    %c0_i32 = arith.constant 0 : i32
    %c0_i32_0 = arith.constant 0 : i32
    return %arg0, %c0_i32 : i32, i32
  }
  func.func @transform_2(%arg0: i32, %arg1: i32) -> (i32, i32) {
    %c0_i32 = arith.constant 0 : i32
    return %arg0, %arg1 : i32, i32
  }
  func.func @transform_3(%arg0: i32, %arg1: i32) -> (i32, i32) {
    %c0_i32 = arith.constant 0 : i32
    return %arg0, %arg1 : i32, i32
  }
}

</mosaic_0001>

<llo_original>
// kernel: eps_model_forward.1
$region0: #{eps_model_forward.1}
  #allocation0 [shape = 'u32[]', space=smem, size = 0x4, offset = 0x4, fixed_abs, tag = 'smem constant byte address 0x4 - core index']
  #allocation1 [shape = 'u32[144,128]{1,0:T(1,128)}', space=vmem, size = 0x12000, scoped, tag = 'internal scratch']
  %s0 = inlined_call_operand.vmem [shape: f32[8,1], index: 0, kind: input, shape index: {}]
  %s1 = inlined_call_operand.vmem [shape: f32[8,1], index: 1, kind: input, shape index: {}]
  %s2 = inlined_call_operand.vmem [shape: f32[8,256], index: 2, kind: input, shape index: {}]
  %s3 = inlined_call_operand.vmem [shape: f32[8,256], index: 3, kind: output, shape index: {}]
  %s4 = sld [smem:[#allocation0]]
  $region22: #{eps_model_forward.1} parent=0
    _
  %s6 = ssub.s32 1, %s4
  %s7 = scalar_select 0, %s6, %s4
  // Predicated region
  $region2: #{eps_model_forward.1} parent=0 // pred_check
    _
  $region3: #{eps_model_forward.1} parent=0 // pred_check_branch
    %9 = sbr.rel (0) target = $region5
  $region4: #{eps_model_forward.1} parent=0 // pred_region
    _
  $region5: #{eps_model_forward.1} parent=0 // pred_fallthru
    _
  // Predicated region
  $region6: #{eps_model_forward.1} parent=0 // pred_check
    _
  $region7: #{eps_model_forward.1} parent=0 // pred_check_branch
    %11 = sbr.rel (0) target = $region9
  $region8: #{eps_model_forward.1} parent=0 // pred_region
    _
  $region9: #{eps_model_forward.1} parent=0 // pred_fallthru
    _
  // Predicated region
  $region10: #{eps_model_forward.1} parent=0 // pred_check
    _
  $region11: #{eps_model_forward.1} parent=0 // pred_check_branch
    %13 = sbr.rel (0) target = $region13
  $region12: #{eps_model_forward.1} parent=0 // pred_region
    _
  $region13: #{eps_model_forward.1} parent=0 // pred_fallthru
    _
  %v14 = vld [vmem:[%s2] sm:$0xff]
  %v15 = vld [vmem:[%s2 + $0x8] sm:$0xff]
  %v16 = vld [vmem:[%s0] sm:$0xff]
  %18 = vset.pattern.permute.xlu0 0
  %19 = vperm.xlu0 %18, %v16
  %v20 = vpop.permute.xlu0 %19
  %v22 = vmul.f32 %v14, %v20
  %v23 = vmul.f32 %v15, %v20
  %v24 = vld [vmem:[%s1] sm:$0xff]
  %26 = vset.pattern.permute.xlu0 0
  %27 = vperm.xlu0 %26, %v24
  %v28 = vpop.permute.xlu0 %27
  %v30 = vadd.f32 %v22, %v28
  %v31 = vadd.f32 %v23, %v28
  %32 = vst [vmem:[%s3] sm:$0xff] %v30
  %33 = vst [vmem:[%s3 + $0x8] sm:$0xff] %v31
  // Predicated region
  $region14: #{eps_model_forward.1} parent=0 // pred_check
    _
  $region15: #{eps_model_forward.1} parent=0 // pred_check_branch
    %35 = sbr.rel (0) target = $region17
  $region16: #{eps_model_forward.1} parent=0 // pred_region
    _
  $region17: #{eps_model_forward.1} parent=0 // pred_fallthru
    _
  // Predicated region
  $region18: #{eps_model_forward.1} parent=0 // pred_check
    _
  $region19: #{eps_model_forward.1} parent=0 // pred_check_branch
    %37 = sbr.rel (0) target = $region21
  $region20: #{eps_model_forward.1} parent=0 // pred_region
    _
  $region21: #{eps_model_forward.1} parent=0 // pred_fallthru
    _

</llo_original>
